<compile_context>
chip_gen: v6e
topology: v6e:2x2x1
jax: 0.10.0
libtpu: 0.0.40
codegen_flags: <defaults>
</compile_context>

<pallas_src>
import jax
import jax.numpy as jnp
from jax.experimental import pallas as pl
from jax.experimental.pallas import tpu as pltpu


LANE = 128          # TPU lane width: keep last dims multiples of this (or full)
TM_MAX = 512        # rows per grid step (review: 512 once F is tiled)
TF_MAX = 512        # ffn columns per grid step (bounds the GELU intermediate)


def _round_up(x, m):
    return (x + m - 1) // m * m


# ----------------------------------------------------------------------------
# Pallas kernel: one (TM, H) row tile x one (TF,) ffn chunk of
#     gelu(x @ W1 + b1) @ W2 + b2
# accumulated over the F grid axis into an f32 VMEM scratch.
# ----------------------------------------------------------------------------
def _mlp_kernel(x_ref, w1_ref, b1_ref, w2_ref, b2_ref, o_ref, acc_ref):
    f = pl.program_id(1)

    @pl.when(f == 0)
    def _():
        acc_ref[...] = jnp.zeros_like(acc_ref)

    # bf16 MXU operands, f32 accumulation.  Cast is in-VMEM (no wrapper pass).
    x = x_ref[...].astype(jnp.bfloat16)                         # (TM, H)
    h = jnp.dot(x, w1_ref[...], preferred_element_type=jnp.float32)
    h = h + b1_ref[...]                                         # (TM, TF) f32
    # tanh-GELU: VALU muls + EUP tanh (EUP has its own VLIW slot).  Kept in f32
    # since v5e has no bf16 VPU/EUP path.
    # TODO(synk): generation-gated bf16 GELU on v6e/v7x.
    h = jax.nn.gelu(h, approximate=True)
    acc_ref[...] += jnp.dot(h.astype(jnp.bfloat16), w2_ref[...],
                            preferred_element_type=jnp.float32)

    @pl.when(f == pl.num_programs(1) - 1)
    def _():
        o_ref[...] = (acc_ref[...] + b2_ref[...]).astype(o_ref.dtype)


# ----------------------------------------------------------------------------
# One-time parameter prep (hoisted out of the per-call / per-remat path).
# ----------------------------------------------------------------------------
def prepare_params(params):
    """bf16 cast + (optional) F padding to a multiple of the F tile.
    Idempotent; call once at init so forward / remat never re-pay this."""
    w1, b1, w2, b2 = params
    H, F = w1.shape
    TF = min(TF_MAX, _round_up(F, LANE))
    Fp = _round_up(F, TF)
    b1 = b1.reshape(1, -1)
    b2 = b2.reshape(1, -1)
    if Fp != F:   # padded cols/rows are zero -> exact result unchanged
        w1 = jnp.pad(w1, ((0, 0), (0, Fp - F)))
        b1 = jnp.pad(b1, ((0, 0), (0, Fp - F)))
        w2 = jnp.pad(w2, ((0, Fp - F), (0, 0)))
    return (w1.astype(jnp.bfloat16), b1.astype(jnp.float32),
            w2.astype(jnp.bfloat16), b2.astype(jnp.float32))


# ----------------------------------------------------------------------------
# Gridded pallas_call wrapper.
# ----------------------------------------------------------------------------
def _mlp_pallas(x2d, w1, b1, w2, b2):
    """x2d: (M, H) (any float dtype);  w1: (H, Fp) bf16;  b1: (1, Fp) f32;
    w2: (Fp, H) bf16;  b2: (1, H) f32.   Returns (M, H) f32."""
    M, H = x2d.shape
    Hw, Fp = w1.shape
    assert Hw == H and w2.shape == (Fp, H)
    TF = min(TF_MAX, Fp)
    assert Fp % TF == 0, "run prepare_params() on the weights first"

    TM = min(TM_MAX, _round_up(M, 16))       # 16-row multiple (bf16 sublanes)
    Mp = _round_up(M, TM)
    xb = x2d if Mp == M else jnp.pad(x2d, ((0, Mp - M), (0, 0)))  # guarded

    n_m, n_f = Mp // TM, Fp // TF
    x_bytes = xb.dtype.itemsize

    # Scoped-VMEM request from the actual tile footprint (+50% headroom),
    # clamped to [32 MiB, 64 MiB] so it is valid on v5e/v6e/v7x.
    vmem_bytes = (2 * TM * H * x_bytes       # x tiles (double-buffered)
                  + 2 * H * TF * 2           # W1 blocks (bf16, pipelined)
                  + 2 * TF * 4               # b1 blocks
                  + 2 * TF * H * 2           # W2 blocks (bf16, pipelined)
                  + 1 * H * 4                # b2 (single-buffered)
                  + 2 * TM * H * 4           # output tiles (f32)
                  + TM * H * 4               # accumulator scratch
                  + TM * TF * 4)             # live GELU intermediate
    vmem_limit = int(min(64 * 2**20, max(32 * 2**20, (vmem_bytes * 3) // 2)))

    cost = pl.CostEstimate(
        flops=int(4 * Mp * H * Fp),          # two GEMMs
        transcendentals=int(Mp * Fp),        # one tanh per GELU element
        bytes_accessed=int(Mp * H * x_bytes + Mp * H * 4 + H * 4
                           + n_m * (H * Fp * 2 + Fp * 4 + Fp * H * 2)),
    )

    out = pl.pallas_call(
        _mlp_kernel,
        out_shape=jax.ShapeDtypeStruct((Mp, H), jnp.float32),
        grid=(n_m, n_f),
        in_specs=[
            pl.BlockSpec((TM, H), lambda i, f: (i, 0)),    # x (pipelined over M)
            pl.BlockSpec((H, TF), lambda i, f: (0, f)),    # W1 (pipelined over F)
            pl.BlockSpec((1, TF), lambda i, f: (0, f)),    # b1
            pl.BlockSpec((TF, H), lambda i, f: (f, 0)),    # W2
            pl.BlockSpec((1, H), lambda i, f: (0, 0),      # b2: constant index
                         pipeline_mode=pl.Buffered(1)),    #   -> single buffer
        ],
        out_specs=pl.BlockSpec((TM, H), lambda i, f: (i, 0)),
        scratch_shapes=[pltpu.VMEM((TM, H), jnp.float32)],
        compiler_params=pltpu.CompilerParams(
            dimension_semantics=("parallel", "arbitrary"),
            vmem_limit_bytes=vmem_limit),
        cost_estimate=cost,
    )(xb, w1, b1, w2, b2)

    return out if Mp == M else out[:M]       # slice only when M was padded


# ----------------------------------------------------------------------------
# Differentiable wrapper (custom_vjp) so jax.checkpoint is fully exercisable.
# ----------------------------------------------------------------------------
def _mlp_math(x2d, w1, b1, w2, b2):
    """Pure-JAX math numerically matching the kernel (bf16 MXU operands)."""
    h = jnp.dot(x2d.astype(jnp.bfloat16), w1.astype(jnp.bfloat16),
                preferred_element_type=jnp.float32) + b1
    h = jax.nn.gelu(h, approximate=True)
    y = jnp.dot(h.astype(jnp.bfloat16), w2.astype(jnp.bfloat16),
                preferred_element_type=jnp.float32) + b2
    return y


@jax.custom_vjp
def mlp_fused(x2d, w1, b1, w2, b2):
    return _mlp_pallas(x2d, w1, b1, w2, b2)


def _mlp_fused_fwd(x2d, w1, b1, w2, b2):
    return _mlp_pallas(x2d, w1, b1, w2, b2), (x2d, w1, b1, w2, b2)


def _mlp_fused_bwd(res, g):
    # TODO(synk): dedicated fused Pallas backward kernels (dX, dW1, db1, dW2,
    # db2) -- biggest remaining end-to-end lever; for now the VJP of the
    # identical pure-JAX math keeps gradients correct.
    _, vjp = jax.vjp(_mlp_math, *res)
    return vjp(g)


mlp_fused.defvjp(_mlp_fused_fwd, _mlp_fused_bwd)


# ----------------------------------------------------------------------------
# CheckpointedModule.forward equivalent.
# ----------------------------------------------------------------------------
def checkpointed_module_forward(x, params):
    """== CheckpointedModule.forward: torch.utils.checkpoint.checkpoint around
    the wrapped module.  jax.checkpoint gives identical forward values with
    recompute-on-backward semantics."""
    w1, b1, w2, b2 = prepare_params(params)   # no-op if already prepared
    B, S, H = x.shape
    y2d = jax.checkpoint(mlp_fused)(x.reshape(B * S, H), w1, b1, w2, b2)
    return y2d.reshape(B, S, -1)


def init_params(key, hidden=32, ffn=128, dtype=jnp.float32):
    k1, k2, k3, k4 = jax.random.split(key, 4)
    w1 = jax.random.normal(k1, (hidden, ffn), dtype) * (1.0 / jnp.sqrt(hidden))
    b1 = jax.random.normal(k2, (1, ffn), dtype) * 0.01
    w2 = jax.random.normal(k3, (ffn, hidden), dtype) * (1.0 / jnp.sqrt(ffn))
    b2 = jax.random.normal(k4, (1, hidden), dtype) * 0.01
    return w1, b1, w2, b2


def _reference_f32(x, raw_params):
    """Original module semantics in pure f32 (loose tolerance: bf16 MXU ops)."""
    w1, b1, w2, b2 = raw_params
    h = x.reshape(-1, x.shape[-1]) @ w1 + b1
    h = jax.nn.gelu(h, approximate=True)
    y = h @ w2 + b2
    return y.reshape(x.shape[0], x.shape[1], -1)


def _reference_kernel_math(x, prepared_params):
    """Reference matching the kernel's bf16-operand numerics (tight tol)."""
    y = _mlp_math(x.reshape(-1, x.shape[-1]), *prepared_params)
    return y.reshape(x.shape[0], x.shape[1], -1)


if __name__ == "__main__":
    key = jax.random.PRNGKey(0)
    kx, kp = jax.random.split(key)

    B, S, H = 2, 8, 32          # batch, seq, hidden (small demo shapes)
    x = jax.random.normal(kx, (B, S, H), jnp.float32)
    raw_params = init_params(kp, hidden=H, ffn=4 * H)
    params = prepare_params(raw_params)   # one-time cast/pad, hoisted to init

    fwd = jax.jit(checkpointed_module_forward)
    out = jax.block_until_ready(fwd(x, params))

    assert out.shape == (B, S, H), out.shape
    # Tight check vs. the same bf16-operand math the kernel performs.
    ref_k = _reference_kernel_math(x, params)
    assert jnp.allclose(out, ref_k, atol=2e-3, rtol=2e-3), "mismatch vs kernel-math ref"
    # Loose check vs. the original f32 module semantics (bf16 MXU rounding).
    ref_f = _reference_f32(x, raw_params)
    assert jnp.allclose(out, ref_f, atol=3e-2, rtol=3e-2), "mismatch vs f32 ref"

    # Exercise checkpointing end-to-end (remat recompute + custom_vjp bwd).
    loss = lambda x, p: jnp.sum(checkpointed_module_forward(x, p))
    gx = jax.block_until_ready(jax.grad(loss)(x, params))
    assert gx.shape == x.shape
    assert bool(jnp.all(jnp.isfinite(gx))), "non-finite gradient"

    print("KERNEL_OK")
</pallas_src>

<mosaic_0001>
module attributes {stable_mosaic.version = 11 : i64} {
  func.func @_mlp_kernel(%arg0: i32, %arg1: i32, %arg2: memref<16x32xf32, #tpu.memory_space<vmem>>, %arg3: memref<32x128xbf16, #tpu.memory_space<vmem>>, %arg4: memref<1x128xf32, #tpu.memory_space<vmem>>, %arg5: memref<128x32xbf16, #tpu.memory_space<vmem>>, %arg6: memref<1x32xf32, #tpu.memory_space<vmem>>, %arg7: memref<16x32xf32, #tpu.memory_space<vmem>>, %arg8: memref<16x32xf32, #tpu.memory_space<vmem>>) attributes {dimension_semantics = [#tpu.dimension_semantics<parallel>, #tpu.dimension_semantics<arbitrary>], iteration_bounds = array<i64: 1, 1>, scalar_prefetch = 0 : i64, scratch_operands = 1 : i64, tpu.core_type = #tpu.core_type<tc>, window_params = [{transform_indices = @transform_0, window_bounds = array<i64: 16, 32>}, {transform_indices = @transform_1, window_bounds = array<i64: 32, 128>}, {transform_indices = @transform_2, window_bounds = array<i64: 1, 128>}, {transform_indices = @transform_3, window_bounds = array<i64: 128, 32>}, {pipeline_mode = #tpu.pipeline_mode<synchronous>, transform_indices = @transform_4, window_bounds = array<i64: 1, 32>}, {transform_indices = @transform_5, window_bounds = array<i64: 16, 32>}]} {
    %c0_i32 = arith.constant 0 : i32
    %0 = arith.cmpi eq, %arg1, %c0_i32 : i32
    %1 = arith.extui %0 : i1 to i32
    %c0_i32_0 = arith.constant 0 : i32
    %2 = arith.cmpi ne, %1, %c0_i32_0 : i32
    scf.if %2 {
      %cst_19 = arith.constant 0.000000e+00 : f32
      %32 = vector.broadcast %cst_19 : f32 to vector<16x32xf32>
      %c0_20 = arith.constant 0 : index
      %c0_21 = arith.constant 0 : index
      %33 = vector.load %arg8[%c0_20, %c0_21] : memref<16x32xf32, #tpu.memory_space<vmem>>, vector<16x32xf32>
      tpu.vector_store %arg8[%c0_20, %c0_21], %32 {strides = array<i32>} : memref<16x32xf32, #tpu.memory_space<vmem>>, vector<16x32xf32>,
    } else {
    }
    %c0 = arith.constant 0 : index
    %c0_1 = arith.constant 0 : index
    %3 = vector.load %arg2[%c0, %c0_1] : memref<16x32xf32, #tpu.memory_space<vmem>>, vector<16x32xf32>
    %4 = arith.truncf %3 : vector<16x32xf32> to vector<16x32xbf16>
    %c0_2 = arith.constant 0 : index
    %c0_3 = arith.constant 0 : index
    %5 = vector.load %arg3[%c0_2, %c0_3] : memref<32x128xbf16, #tpu.memory_space<vmem>>, vector<32x128xbf16>
    %cst = arith.constant dense<0.000000e+00> : vector<16x128xf32>
    %6 = tpu.matmul %4, %5, %cst {dimension_numbers = #tpu.dot_dimension_numbers<[1], [0], [0], [1], [0, 0, 1, 1], [], []>} : vector<16x32xbf16>, vector<32x128xbf16>, vector<16x128xf32> -> vector<16x128xf32>
    %c0_4 = arith.constant 0 : index
    %c0_5 = arith.constant 0 : index
    %7 = vector.load %arg4[%c0_4, %c0_5] : memref<1x128xf32, #tpu.memory_space<vmem>>, vector<1x128xf32>
    %8 = vector.broadcast %7 : vector<1x128xf32> to vector<16x128xf32>
    %9 = arith.addf %6, %8 : vector<16x128xf32>
    %10 = arith.mulf %9, %9 : vector<16x128xf32>
    %11 = arith.mulf %9, %10 : vector<16x128xf32>
    %cst_6 = arith.constant 4.471500e-02 : f32
    %12 = vector.broadcast %cst_6 : f32 to vector<16x128xf32>
    %13 = arith.mulf %12, %11 : vector<16x128xf32>
    %14 = arith.addf %9, %13 : vector<16x128xf32>
    %cst_7 = arith.constant 0.797884583 : f32
    %15 = vector.broadcast %cst_7 : f32 to vector<16x128xf32>
    %16 = arith.mulf %15, %14 : vector<16x128xf32>
    %17 = math.tanh %16 : vector<16x128xf32>
    %cst_8 = arith.constant 1.000000e+00 : f32
    %18 = vector.broadcast %cst_8 : f32 to vector<16x128xf32>
    %19 = arith.addf %18, %17 : vector<16x128xf32>
    %cst_9 = arith.constant 5.000000e-01 : f32
    %20 = vector.broadcast %cst_9 : f32 to vector<16x128xf32>
    %21 = arith.mulf %20, %19 : vector<16x128xf32>
    %22 = arith.mulf %9, %21 : vector<16x128xf32>
    %c0_10 = arith.constant 0 : index
    %c0_11 = arith.constant 0 : index
    %23 = vector.load %arg8[%c0_10, %c0_11] : memref<16x32xf32, #tpu.memory_space<vmem>>, vector<16x32xf32>
    %24 = arith.truncf %22 : vector<16x128xf32> to vector<16x128xbf16>
    %c0_12 = arith.constant 0 : index
    %c0_13 = arith.constant 0 : index
    %25 = vector.load %arg5[%c0_12, %c0_13] : memref<128x32xbf16, #tpu.memory_space<vmem>>, vector<128x32xbf16>
    %cst_14 = arith.constant dense<0.000000e+00> : vector<16x32xf32>
    %26 = tpu.matmul %24, %25, %cst_14 {dimension_numbers = #tpu.dot_dimension_numbers<[1], [0], [0], [1], [0, 0, 1, 1], [], []>} : vector<16x128xbf16>, vector<128x32xbf16>, vector<16x32xf32> -> vector<16x32xf32>
    %27 = arith.addf %23, %26 : vector<16x32xf32>
    %c0_15 = arith.constant 0 : index
    %c0_16 = arith.constant 0 : index
    %28 = vector.load %arg8[%c0_15, %c0_16] : memref<16x32xf32, #tpu.memory_space<vmem>>, vector<16x32xf32>
    tpu.vector_store %arg8[%c0_15, %c0_16], %27 {strides = array<i32>} : memref<16x32xf32, #tpu.memory_space<vmem>>, vector<16x32xf32>,
    %c0_i32_17 = arith.constant 0 : i32
    %29 = arith.cmpi eq, %arg1, %c0_i32_17 : i32
    %30 = arith.extui %29 : i1 to i32
    %c0_i32_18 = arith.constant 0 : i32
    %31 = arith.cmpi ne, %30, %c0_i32_18 : i32
    scf.if %31 {
      %c0_19 = arith.constant 0 : index
      %c0_20 = arith.constant 0 : index
      %32 = vector.load %arg8[%c0_19, %c0_20] : memref<16x32xf32, #tpu.memory_space<vmem>>, vector<16x32xf32>
      %c0_21 = arith.constant 0 : index
      %c0_22 = arith.constant 0 : index
      %33 = vector.load %arg6[%c0_21, %c0_22] : memref<1x32xf32, #tpu.memory_space<vmem>>, vector<1x32xf32>
      %34 = vector.broadcast %33 : vector<1x32xf32> to vector<16x32xf32>
      %35 = arith.addf %32, %34 : vector<16x32xf32>
      %c0_23 = arith.constant 0 : index
      %c0_24 = arith.constant 0 : index
      %36 = vector.load %arg7[%c0_23, %c0_24] : memref<16x32xf32, #tpu.memory_space<vmem>>, vector<16x32xf32>
      tpu.vector_store %arg7[%c0_23, %c0_24], %35 {strides = array<i32>} : memref<16x32xf32, #tpu.memory_space<vmem>>, vector<16x32xf32>,
    } else {
    }
    return
  }
  func.func @transform_0(%arg0: i32, %arg1: i32) -> (i32, i32) {
    %c0_i32 = arith.constant 0 : i32
    %c0_i32_0 = arith.constant 0 : i32
    return %arg0, %c0_i32 : i32, i32
  }
  func.func @transform_1(%arg0: i32, %arg1: i32) -> (i32, i32) {
    %c0_i32 = arith.constant 0 : i32
    %c0_i32_0 = arith.constant 0 : i32
    return %c0_i32, %arg1 : i32, i32
  }
  func.func @transform_2(%arg0: i32, %arg1: i32) -> (i32, i32) {
    %c0_i32 = arith.constant 0 : i32
    %c0_i32_0 = arith.constant 0 : i32
    return %c0_i32, %arg1 : i32, i32
  }
  func.func @transform_3(%arg0: i32, %arg1: i32) -> (i32, i32) {
    %c0_i32 = arith.constant 0 : i32
    %c0_i32_0 = arith.constant 0 : i32
    return %arg1, %c0_i32 : i32, i32
  }
  func.func @transform_4(%arg0: i32, %arg1: i32) -> (i32, i32) {
    %c0_i32 = arith.constant 0 : i32
    %c0_i32_0 = arith.constant 0 : i32
    %c0_i32_1 = arith.constant 0 : i32
    return %c0_i32, %c0_i32_0 : i32, i32
  }
  func.func @transform_5(%arg0: i32, %arg1: i32) -> (i32, i32) {
    %c0_i32 = arith.constant 0 : i32
    %c0_i32_0 = arith.constant 0 : i32
    return %arg0, %c0_i32 : i32, i32
  }
}

</mosaic_0001>

<llo_original>
// kernel: checkpoint.1
$region0: #{checkpoint.1}
  #allocation0 [shape = 'u32[]', space=smem, size = 0x4, offset = 0x4, fixed_abs, tag = 'smem constant byte address 0x4 - core index']
  #allocation1 [shape = 'u32[144,128]{1,0:T(1,128)}', space=vmem, size = 0x12000, scoped, tag = 'internal scratch']
  #allocation2 [shape = 'f32[16,32]{1,0:T(8,128)}', space=vmem, size = 0x2000, scoped, tag = 'scratch operand']
  %s0 = inlined_call_operand.vmem [shape: f32[16,32], index: 0, kind: input, shape index: {}]
  %s1 = inlined_call_operand.vmem [shape: bf16[32,128], index: 1, kind: input, shape index: {}]
  %s2 = inlined_call_operand.vmem [shape: f32[1,128], index: 2, kind: input, shape index: {}]
  %s3 = inlined_call_operand.vmem [shape: bf16[128,32], index: 3, kind: input, shape index: {}]
  %s4 = inlined_call_operand.vmem [shape: f32[1,32], index: 4, kind: input, shape index: {}]
  %s5 = inlined_call_operand.hbm [shape: f32[16,32], index: 5, kind: output, shape index: {}]
  %s6 = sld [smem:[#allocation0]]
  $region38: #{checkpoint.1} parent=0
    _
  %s8 = ssub.s32 1, %s6
  %s9 = scalar_select 0, %s8, %s6
  $region1: #{checkpoint.1} parent=0
    #allocation3 [shape = 'u8[8192]{0}', space=vmem, size = 0x2000, scoped, tag = 'output window, operand 0, single buffered']
    #allocation4 [shape = 's32[1]{0}', space=sflag, size = 0x4, scoped, tag = 'scoped memory for checkpoint.1']
    %10 = vsyncpa [#allocation4], 0
    // Predicated region
    $region2: #{checkpoint.1} parent=1 // pred_check
      _
    $region3: #{checkpoint.1} parent=1 // pred_check_branch
      %12 = sbr.rel (0) target = $region5
    $region4: #{checkpoint.1} parent=1 // pred_region
      _
    $region5: #{checkpoint.1} parent=1 // pred_fallthru
      _
    // Predicated region
    $region6: #{checkpoint.1} parent=1 // pred_check
      _
    $region7: #{checkpoint.1} parent=1 // pred_check_branch
      %14 = sbr.rel (0) target = $region9
    $region8: #{checkpoint.1} parent=1 // pred_region
      _
    $region9: #{checkpoint.1} parent=1 // pred_fallthru
      _
    // Predicated region
    $region10: #{checkpoint.1} parent=1 // pred_check
      _
    $region11: #{checkpoint.1} parent=1 // pred_check_branch
      %16 = sbr.rel (0) target = $region13
    $region12: #{checkpoint.1} parent=1 // pred_region
      _
    $region13: #{checkpoint.1} parent=1 // pred_fallthru
      _
    // Predicated region
    $region14: #{checkpoint.1} parent=1 // pred_check
      _
    $region15: #{checkpoint.1} parent=1 // pred_check_branch
      %18 = sbr.rel (0) target = $region17
    $region16: #{checkpoint.1} parent=1 // pred_region
      _
    $region17: #{checkpoint.1} parent=1 // pred_fallthru
      _
    // Predicated region
    $region18: #{checkpoint.1} parent=1 // pred_check
      _
    $region19: #{checkpoint.1} parent=1 // pred_check_branch
      %20 = sbr.rel (0) target = $region21
    $region20: #{checkpoint.1} parent=1 // pred_region
      _
    $region21: #{checkpoint.1} parent=1 // pred_fallthru
      _
    %p22 = scmp.eq.s32.totalorder 0, 0
    // Predicated region
    $region22: #{checkpoint.1} parent=1 // pred_check
      %p23 = pneg %p22
    $region23: #{checkpoint.1} parent=1 // pred_check_branch
      %25 = sbr.rel (%p23) target = $region25
    $region24: #{checkpoint.1} parent=1 // pred_region
      %vm26 = vcmask 261120
      %27 = vst.msk [vmem:[#allocation2] sm:$0xff] %vm26, 0.0
      %28 = vst.msk [vmem:[#allocation2 + $0x8] sm:$0xff] %vm26, 0.0
    $region25: #{checkpoint.1} parent=1 // pred_fallthru
      _
    %v29 = vld [vmem:[%s0] sm:$0xff]
    %v30 = vld [vmem:[%s0 + $0x8] sm:$0xff]
    %v31 = vpack.c.bf16 %v30, %v29
    %v32 = vld [vmem:[%s1] sm:$0xf]
    %v33 = vld [vmem:[%s1 + $0x4] sm:$0xf]
    %v34 = vld [vmem:[%s1 + $0x8] sm:$0xf]
    %v35 = vld [vmem:[%s1 + $0xc] sm:$0xf]
    %v36 = vld [vmem:[%s2] sm:$0x1]
    %v38 = vlaneseq
    %v39 = vshrl.u32 %v38, 7
    %v40 = vsub.s32 0, %v39
    %v41 = vrot.slane %v36, %v40
    %v47 = vunpack.c.l.b16 %v32
    %v48 = vunpack.c.l.b16 %v33
    %v49 = vunpack.c.l.b16 %v34
    %v50 = vunpack.c.l.b16 %v35
    %v51 = vpack.c.b16 %v48, %v47
    %v52 = vpack.c.b16 %v50, %v49
    %vm55 = vcmask 261120
    %v57 = vsel %vm55, %v31, 0
    %59 = vmatprep.subr.bf16.mxu0 0
    %60 = vmatpush1.bf16.msra.mxu0 0
    %61 = vmatprep.subr.bf16.mxu0 0
    %62 = vmatpush1.bf16.msra.mxu0 0
    %63 = vmatprep.subr.bf16.mxu0 0
    %64 = vmatpush1.bf16.msra.mxu0 0
    %65 = vmatprep.subr.bf16.mxu0 0
    %66 = vmatpush1.bf16.msra.mxu0 0
    %67 = vmatprep.subr.bf16.mxu0 0
    %68 = vmatpush1.bf16.msra.mxu0 0
    %69 = vmatprep.subr.bf16.mxu0 0
    %70 = vmatpush1.bf16.msra.mxu0 0
    %71 = vmatprep.subr.bf16.mxu0 0
    %72 = vmatpush1.bf16.msra.mxu0 %v52
    %73 = vmatprep.subr.bf16.mxu0 0
    %74 = vmatpush1.bf16.msra.mxu0 %v51
    %75 = vmatprep.subr.bf16.mxu0 0
    %76 = vmatpush2.bf16.msra.mxu0 0
    %77 = vmatprep.subr.bf16.mxu0 0
    %78 = vmatpush2.bf16.msra.mxu0 0
    %79 = vmatprep.subr.bf16.mxu0 0
    %80 = vmatpush2.bf16.msra.mxu0 0
    %81 = vmatprep.subr.bf16.mxu0 0
    %82 = vmatpush2.bf16.msra.mxu0 0
    %83 = vmatprep.subr.bf16.mxu0 0
    %84 = vmatpush2.bf16.msra.mxu0 0
    %85 = vmatprep.subr.bf16.mxu0 0
    %86 = vmatpush2.bf16.msra.mxu0 0
    %87 = vmatprep.subr.bf16.mxu0 0
    %88 = vmatpush2.bf16.msra.mxu0 0
    %89 = vmatprep.subr.bf16.mxu0 0
    %90 = vmatpush2.bf16.msra.mxu0 0
    %91 = vmatprep.mubr.bf16.mxu0 0
    %92 = vmatmul.mubr.bf16.gmra.mxu0 %v57
    %v93 = vpop.f32.mrf.mxu0
    %v94 = vadd.f32 %v41, %v93
    %v95 = vpop.f32.mrf.mxu0
    %v96 = vpop.f32.mrf.mxu0
    %v97 = vadd.f32 %v41, %v96
    %v98 = vpop.f32.mrf.mxu0
    %99 = vdwg.mxu0
    %v100 = vmul.f32 %v94, %v94
    %v101 = vmul.f32 %v97, %v97
    %v102 = vmul.f32 %v94, %v100
    %v103 = vmul.f32 %v97, %v101
    %v104 = vmul.f32 %v102, 0.044715
    %v105 = vmul.f32 %v103, 0.044715
    %v106 = vadd.f32 %v94, %v104
    %v107 = vadd.f32 %v97, %v105
    %v108 = vmul.f32 %v106, 0.7978846
    %v109 = vmul.f32 %v107, 0.7978846
    %v110 = vtanh.pop %v108
    %v111 = vtanh.pop %v109
    %v112 = vadd.f32 %v110, 1.0
    %v113 = vadd.f32 %v111, 1.0
    %v114 = vmul.f32 %v112, 0.5
    %v115 = vmul.f32 %v113, 0.5
    %v116 = vmul.f32 %v94, %v114
    %v117 = vmul.f32 %v97, %v115
    %v118 = vld [vmem:[#allocation2] sm:$0xff]
    %v119 = vld [vmem:[#allocation2 + $0x8] sm:$0xff]
    %v120 = vpack.c.bf16 %v117, %v116
    %v121 = vld [vmem:[%s3] sm:$0xf]
    %v122 = vld [vmem:[%s3 + $0x4] sm:$0xf]
    %v123 = vld [vmem:[%s3 + $0x8] sm:$0xf]
    %v124 = vld [vmem:[%s3 + $0xc] sm:$0xf]
    %v125 = vld [vmem:[%s3 + $0x10] sm:$0xf]
    %v126 = vld [vmem:[%s3 + $0x14] sm:$0xf]
    %v127 = vld [vmem:[%s3 + $0x18] sm:$0xf]
    %v128 = vld [vmem:[%s3 + $0x1c] sm:$0xf]
    %v129 = vld [vmem:[%s3 + $0x20] sm:$0xf]
    %v130 = vld [vmem:[%s3 + $0x24] sm:$0xf]
    %v131 = vld [vmem:[%s3 + $0x28] sm:$0xf]
    %v132 = vld [vmem:[%s3 + $0x2c] sm:$0xf]
    %v133 = vld [vmem:[%s3 + $0x30] sm:$0xf]
    %v134 = vld [vmem:[%s3 + $0x34] sm:$0xf]
    %v135 = vld [vmem:[%s3 + $0x38] sm:$0xf]
    %v136 = vld [vmem:[%s3 + $0x3c] sm:$0xf]
    %v153 = vunpack.c.l.b16 %v121
    %v154 = vunpack.c.l.b16 %v122
    %v155 = vunpack.c.l.b16 %v123
    %v156 = vunpack.c.l.b16 %v124
    %v157 = vunpack.c.l.b16 %v125
    %v158 = vunpack.c.l.b16 %v126
    %v159 = vunpack.c.l.b16 %v127
    %v160 = vunpack.c.l.b16 %v128
    %v161 = vunpack.c.l.b16 %v129
    %v162 = vunpack.c.l.b16 %v130
    %v163 = vunpack.c.l.b16 %v131
    %v164 = vunpack.c.l.b16 %v132
    %v165 = vunpack.c.l.b16 %v133
    %v166 = vunpack.c.l.b16 %v134
    %v167 = vunpack.c.l.b16 %v135
    %v168 = vunpack.c.l.b16 %v136
    %v169 = vpack.c.b16 %v154, %v153
    %v170 = vpack.c.b16 %v156, %v155
    %v171 = vpack.c.b16 %v158, %v157
    %v172 = vpack.c.b16 %v160, %v159
    %v173 = vpack.c.b16 %v162, %v161
    %v174 = vpack.c.b16 %v164, %v163
    %v175 = vpack.c.b16 %v166, %v165
    %v176 = vpack.c.b16 %v168, %v167
    %185 = vmatprep.subr.bf16.mxu0 0
    %186 = vmatpush1.bf16.msra.mxu0 %v176
    %187 = vmatprep.subr.bf16.mxu0 0
    %188 = vmatpush1.bf16.msra.mxu0 %v175
    %189 = vmatprep.subr.bf16.mxu0 0
    %190 = vmatpush1.bf16.msra.mxu0 %v174
    %191 = vmatprep.subr.bf16.mxu0 0
    %192 = vmatpush1.bf16.msra.mxu0 %v173
    %193 = vmatprep.subr.bf16.mxu0 0
    %194 = vmatpush1.bf16.msra.mxu0 %v172
    %195 = vmatprep.subr.bf16.mxu0 0
    %196 = vmatpush1.bf16.msra.mxu0 %v171
    %197 = vmatprep.subr.bf16.mxu0 0
    %198 = vmatpush1.bf16.msra.mxu0 %v170
    %199 = vmatprep.subr.bf16.mxu0 0
    %200 = vmatpush1.bf16.msra.mxu0 %v169
    %201 = vmatprep.subr.bf16.mxu0 0
    %202 = vmatpush2.bf16.msra.mxu0 0
    %203 = vmatprep.subr.bf16.mxu0 0
    %204 = vmatpush2.bf16.msra.mxu0 0
    %205 = vmatprep.subr.bf16.mxu0 0
    %206 = vmatpush2.bf16.msra.mxu0 0
    %207 = vmatprep.subr.bf16.mxu0 0
    %208 = vmatpush2.bf16.msra.mxu0 0
    %209 = vmatprep.subr.bf16.mxu0 0
    %210 = vmatpush2.bf16.msra.mxu0 0
    %211 = vmatprep.subr.bf16.mxu0 0
    %212 = vmatpush2.bf16.msra.mxu0 0
    %213 = vmatprep.subr.bf16.mxu0 0
    %214 = vmatpush2.bf16.msra.mxu0 0
    %215 = vmatprep.subr.bf16.mxu0 0
    %216 = vmatpush2.bf16.msra.mxu0 0
    %217 = vmatprep.mubr.bf16.mxu0 0
    %218 = vmatmul.mubr.bf16.gmra.mxu0 %v120
    %v219 = vpop.f32.mrf.mxu0
    %v220 = vadd.f32 0.0, %v219
    %v221 = vpop.f32.mrf.mxu0
    %v222 = vpop.f32.mrf.mxu0
    %v223 = vadd.f32 0.0, %v222
    %v224 = vpop.f32.mrf.mxu0
    %225 = vdwg.mxu0
    %v226 = vadd.f32 %v118, %v220
    %v227 = vadd.f32 %v119, %v223
    %228 = vst.msk [vmem:[#allocation2] sm:$0xff] %vm55, %v226
    %229 = vst.msk [vmem:[#allocation2 + $0x8] sm:$0xff] %vm55, %v227
    // Predicated region
    $region26: #{checkpoint.1} parent=1 // pred_check
      %p230 = pneg %p22
    $region27: #{checkpoint.1} parent=1 // pred_check_branch
      %232 = sbr.rel (%p230) target = $region29
    $region28: #{checkpoint.1} parent=1 // pred_region
      %v233 = vld [vmem:[#allocation2] sm:$0xff]
      %v234 = vld [vmem:[#allocation2 + $0x8] sm:$0xff]
      %v235 = vld [vmem:[%s4] sm:$0x1]
      %v237 = vlaneseq
      %v238 = vshrl.u32 %v237, 7
      %v239 = vsub.s32 0, %v238
      %v240 = vrot.slane %v235, %v239
      %v242 = vadd.f32 %v233, %v240
      %v243 = vadd.f32 %v234, %v240
      %244 = vst.msk [vmem:[#allocation3] sm:$0xff] %vm55, %v242
      %245 = vst.msk [vmem:[#allocation3 + $0x8] sm:$0xff] %vm55, %v243
    $region29: #{checkpoint.1} parent=1 // pred_fallthru
      _
    // Predicated region
    $region30: #{checkpoint.1} parent=1 // pred_check
      _
    $region31: #{checkpoint.1} parent=1 // pred_check_branch
      %247 = sbr.rel (0) target = $region33
    $region32: #{checkpoint.1} parent=1 // pred_region
      %s249 = ssub.s32 256, 256
      %250 = vsyncadd [#allocation4], %s249
      %s251 = sshll.u32 [#allocation3], 4
      %s252 = int_to_ptr.vmem [resolvable:$true] %s251
      %257 = dma.vmem_to_hbm [thread:$0]  %s252, 256, %s5, [#allocation4], 128, 128, 8
    $region33: #{checkpoint.1} parent=1 // pred_fallthru
      _
    // Predicated region
    $region34: #{checkpoint.1} parent=1 // pred_check
      _
    $region35: #{checkpoint.1} parent=1 // pred_check_branch
      %259 = sbr.rel (0) target = $region37
    $region36: #{checkpoint.1} parent=1 // pred_region
      %260 = dma.done [#allocation4], 256
    $region37: #{checkpoint.1} parent=1 // pred_fallthru
      _
    %261 = vsyncpa [#allocation4], 1

</llo_original>
